<compile_context>
chip_gen: v7x
topology: tpu7x:2x2x1
jax: 0.10.0
libtpu: 0.0.40
codegen_flags: <defaults>
</compile_context>

<pallas_src>
import functools

import jax
import jax.numpy as jnp
from jax import lax
from jax.experimental import pallas as pl
from jax.experimental.pallas import tpu as pltpu


# ----------------------------------------------------------------------------
# Kernel 1: dense projection  y = x @ W^T + b   (W kept in PyTorch (out, in) layout)
# ----------------------------------------------------------------------------
def _linear_kernel(x_ref, w_ref, b_ref, o_ref):
    # Contract dim 1 of both operands: x (tm, K) . W (Nout, K) -> (tm, Nout).
    acc = lax.dot_general(
        x_ref[...], w_ref[...],
        dimension_numbers=(((1,), (1,)), ((), ())),
        preferred_element_type=jnp.float32)
    o_ref[...] = (acc + b_ref[...].astype(jnp.float32)).astype(o_ref.dtype)


def pallas_linear(x, w, b, *, block_m=512):
    """x: (M, K), w: (Nout, K) [PyTorch layout], b: (Nout,) -> (M, Nout).

    Tiles the token axis M with a parallel grid (pipelined, shards across the two
    TensorCores on v7x). K and Nout are kept whole per step (fits VMEM for the
    embed dims this module targets).
    """
    M, K = x.shape
    Nout, K2 = w.shape
    assert K == K2 and b.shape == (Nout,)
    tm = M if M <= block_m else block_m  # tm is a multiple of 8 or the full M
    grid_m = pl.cdiv(M, tm)
    # TODO(synk): add K / Nout tiling with an f32 VMEM accumulator for very large E.
    return pl.pallas_call(
        _linear_kernel,
        out_shape=jax.ShapeDtypeStruct((M, Nout), x.dtype),
        grid=(grid_m,),
        in_specs=[
            pl.BlockSpec((tm, K), lambda i: (i, 0)),
            pl.BlockSpec((Nout, K), lambda i: (0, 0)),
            pl.BlockSpec((1, Nout), lambda i: (0, 0)),
        ],
        out_specs=pl.BlockSpec((tm, Nout), lambda i: (i, 0)),
        compiler_params=pltpu.CompilerParams(dimension_semantics=("parallel",)),
    )(x, w, b.reshape(1, Nout))


# ----------------------------------------------------------------------------
# Kernel 2: scaled dot-product attention, one batch element (all heads) per step.
#   q/k/v blocks: (len, 1, H, hd); attention output written directly in (L, N, E)
#   layout; head-averaged weights accumulated in f32 inside the kernel.
# ----------------------------------------------------------------------------
def _attend_one_head(q, k, v):
    # q: (L, hd), k/v: (S, hd) in the input dtype (1/sqrt(hd) already folded into q).
    s = lax.dot_general(q, k, (((1,), (1,)), ((), ())),
                        preferred_element_type=jnp.float32)          # (L, S) f32
    s = s - jnp.max(s, axis=-1, keepdims=True)                       # stable softmax
    e = jnp.exp(s)
    denom = jnp.sum(e, axis=-1, keepdims=True)
    r = pl.reciprocal(denom, approx=True)                            # EUP slot
    r = r * (2.0 - denom * r)                                        # Newton step -> f32 acc.
    p = e * r                                                        # (L, S) f32
    o = lax.dot_general(p.astype(v.dtype), v, (((1,), (0,)), ((), ())),
                        preferred_element_type=jnp.float32)          # (L, hd) f32
    return p, o


def _attn_kernel_weights(q_ref, k_ref, v_ref, o_ref, w_ref, *, num_heads):
    H = num_heads
    w_acc = jnp.zeros(w_ref.shape[1:], jnp.float32)                  # (L, S) f32 accumulator
    for h in range(H):                                               # static unroll over heads
        p, o = _attend_one_head(q_ref[:, 0, h, :], k_ref[:, 0, h, :], v_ref[:, 0, h, :])
        o_ref[:, 0, h, :] = o.astype(o_ref.dtype)
        w_acc = w_acc + p
    w_ref[0] = (w_acc * (1.0 / H)).astype(w_ref.dtype)


def _attn_kernel_noweights(q_ref, k_ref, v_ref, o_ref, *, num_heads):
    for h in range(num_heads):
        _, o = _attend_one_head(q_ref[:, 0, h, :], k_ref[:, 0, h, :], v_ref[:, 0, h, :])
        o_ref[:, 0, h, :] = o.astype(o_ref.dtype)


def pallas_attention(q, k, v, *, need_weights=True):
    """q: (L, N, H, hd), k/v: (S, N, H, hd) -> (out (L, N, H, hd), weights (N, L, S) f32 | None)."""
    L, N, H, hd = q.shape
    S = k.shape[0]
    qkv_specs = [
        pl.BlockSpec((L, 1, H, hd), lambda n: (0, n, 0, 0)),
        pl.BlockSpec((S, 1, H, hd), lambda n: (0, n, 0, 0)),
        pl.BlockSpec((S, 1, H, hd), lambda n: (0, n, 0, 0)),
    ]
    o_spec = pl.BlockSpec((L, 1, H, hd), lambda n: (0, n, 0, 0))
    cp = pltpu.CompilerParams(dimension_semantics=("parallel",))
    if need_weights:
        out, w = pl.pallas_call(
            functools.partial(_attn_kernel_weights, num_heads=H),
            out_shape=(jax.ShapeDtypeStruct((L, N, H, hd), q.dtype),
                       jax.ShapeDtypeStruct((N, L, S), jnp.float32)),
            grid=(N,),
            in_specs=qkv_specs,
            out_specs=(o_spec, pl.BlockSpec((1, L, S), lambda n: (n, 0, 0))),
            compiler_params=cp,
        )(q, k, v)
        return out, w
    out = pl.pallas_call(
        functools.partial(_attn_kernel_noweights, num_heads=H),
        out_shape=jax.ShapeDtypeStruct((L, N, H, hd), q.dtype),
        grid=(N,),
        in_specs=qkv_specs,
        out_specs=o_spec,
        compiler_params=cp,
    )(q, k, v)
    return out, None


# ----------------------------------------------------------------------------
# MultiheadAttention forward (dropout_p = 0, no masks)
# ----------------------------------------------------------------------------
def multihead_attention_forward(query, key, value, params, num_heads, need_weights=True):
    L, N, E = query.shape
    S = key.shape[0]
    H = num_heads
    hd = E // H
    scale = float(hd) ** -0.5

    in_w = params["in_proj_weight"]      # (3E, E)  PyTorch layout (out, in)
    in_b = params["in_proj_bias"]        # (3E,)
    out_w = params["out_proj_weight"]    # (E, E)
    out_b = params["out_proj_bias"]      # (E,)

    # Fold 1/sqrt(head_dim) into the Q projection (tiny one-time elementwise op;
    # in production this would be pre-folded into the params once).
    qscale = jnp.concatenate(
        [jnp.full((E,), scale, in_w.dtype), jnp.ones((2 * E,), in_w.dtype)])
    w_all = in_w * qscale[:, None]
    b_all = in_b * qscale.astype(in_b.dtype)

    # --- input projections (fused when tensors are shared, PyTorch-style) -------
    if (query is key) and (key is value):
        qkv = pallas_linear(query.reshape(L * N, E), w_all, b_all)      # (L*N, 3E)
        q, k, v = qkv[:, :E], qkv[:, E:2 * E], qkv[:, 2 * E:]
    elif key is value:
        q = pallas_linear(query.reshape(L * N, E), w_all[:E], b_all[:E])
        kv = pallas_linear(key.reshape(S * N, E), w_all[E:], b_all[E:])  # (S*N, 2E)
        k, v = kv[:, :E], kv[:, E:]
    else:
        q = pallas_linear(query.reshape(L * N, E), w_all[:E], b_all[:E])
        k = pallas_linear(key.reshape(S * N, E), w_all[E:2 * E], b_all[E:2 * E])
        v = pallas_linear(value.reshape(S * N, E), w_all[2 * E:], b_all[2 * E:])

    # (tokens, E) -> (len, batch, heads, head_dim): pure reshapes, no HBM transposes.
    q = q.reshape(L, N, H, hd)
    k = k.reshape(S, N, H, hd)
    v = v.reshape(S, N, H, hd)

    # --- attention core --------------------------------------------------------
    attn_out, attn_w = pallas_attention(q, k, v, need_weights=need_weights)
    # attn_out is already in (L, N, H, hd) == (L, N, E) layout -> only a reshape.

    # --- output projection ------------------------------------------------------
    out = pallas_linear(attn_out.reshape(L * N, E), out_w, out_b).reshape(L, N, E)
    return out, attn_w

    # TODO(synk): dropout on attention weights, attn_mask / key_padding_mask,
    # add_bias_kv / add_zero_attn not implemented (module defaults disable them).


# ----------------------------------------------------------------------------
# Deterministic parameter init (mirrors module __init__ shapes)
# ----------------------------------------------------------------------------
def init_params(key, embed_dim):
    E = embed_dim
    k1, k2 = jax.random.split(key)
    bound_in = (6.0 / (3 * E + E)) ** 0.5
    in_proj_weight = jax.random.uniform(k1, (3 * E, E), jnp.float32, -bound_in, bound_in)
    bound_out = (1.0 / E) ** 0.5
    out_proj_weight = jax.random.uniform(k2, (E, E), jnp.float32, -bound_out, bound_out)
    return {
        "in_proj_weight": in_proj_weight,
        "in_proj_bias": jnp.zeros((3 * E,), jnp.float32),
        "out_proj_weight": out_proj_weight,
        "out_proj_bias": jnp.zeros((E,), jnp.float32),
    }


# ----------------------------------------------------------------------------
# Pure-JAX reference for sanity check
# ----------------------------------------------------------------------------
def reference_forward(query, key, value, params, num_heads):
    L, N, E = query.shape
    S = key.shape[0]
    H = num_heads
    hd = E // H
    scale = float(hd) ** -0.5
    in_w, in_b = params["in_proj_weight"], params["in_proj_bias"]
    q = query @ in_w[:E].T + in_b[:E]
    k = key @ in_w[E:2 * E].T + in_b[E:2 * E]
    v = value @ in_w[2 * E:].T + in_b[2 * E:]
    q = (q * scale).reshape(L, N * H, hd).transpose(1, 0, 2)
    k = k.reshape(S, N * H, hd).transpose(1, 0, 2)
    v = v.reshape(S, N * H, hd).transpose(1, 0, 2)
    s = jnp.einsum("blh,bsh->bls", q, k)
    p = jax.nn.softmax(s, axis=-1)
    o = jnp.einsum("bls,bsh->blh", p, v)
    o = o.transpose(1, 0, 2).reshape(L, N, E)
    o = o @ params["out_proj_weight"].T + params["out_proj_bias"]
    return o, p.reshape(N, H, L, S).sum(1) / H


if __name__ == "__main__":
    L, S, N, E, H = 8, 8, 2, 32, 4

    root = jax.random.PRNGKey(0)
    kp, kq, kk, kv = jax.random.split(root, 4)
    params = init_params(kp, E)

    query = jax.random.normal(kq, (L, N, E), jnp.float32)
    key = jax.random.normal(kk, (S, N, E), jnp.float32)
    value = jax.random.normal(kv, (S, N, E), jnp.float32)

    # 1) General path (distinct q/k/v), need_weights=True.
    attn_out, attn_w = multihead_attention_forward(query, key, value, params, H)
    jax.block_until_ready((attn_out, attn_w))
    ref_out, ref_w = reference_forward(query, key, value, params, H)
    assert attn_out.shape == (L, N, E)
    assert attn_w.shape == (N, L, S)
    assert jnp.allclose(attn_out, ref_out, atol=1e-3, rtol=1e-3)
    assert jnp.allclose(attn_w, ref_w, atol=1e-3, rtol=1e-3)

    # 2) Fused self-attention path (query is key is value), need_weights=False.
    out2, w2 = multihead_attention_forward(query, query, query, params, H,
                                           need_weights=False)
    jax.block_until_ready(out2)
    ref_out2, _ = reference_forward(query, query, query, params, H)
    assert w2 is None
    assert jnp.allclose(out2, ref_out2, atol=1e-3, rtol=1e-3)

    print("KERNEL_OK")
</pallas_src>

<mosaic_0001>
module attributes {stable_mosaic.version = 11 : i64} {
  func.func @_linear_kernel(%arg0: i32, %arg1: memref<16x32xf32, #tpu.memory_space<vmem>>, %arg2: memref<32x32xf32, #tpu.memory_space<vmem>>, %arg3: memref<1x32xf32, #tpu.memory_space<vmem>>, %arg4: memref<16x32xf32, #tpu.memory_space<vmem>>) attributes {dimension_semantics = [#tpu.dimension_semantics<parallel>], iteration_bounds = array<i64: 1>, scalar_prefetch = 0 : i64, scratch_operands = 0 : i64, tpu.core_type = #tpu.core_type<tc>, window_params = [{transform_indices = @transform_0, window_bounds = array<i64: 16, 32>}, {pipeline_mode = #tpu.pipeline_mode<synchronous>, transform_indices = @transform_1, window_bounds = array<i64: 32, 32>}, {pipeline_mode = #tpu.pipeline_mode<synchronous>, transform_indices = @transform_2, window_bounds = array<i64: 1, 32>}, {transform_indices = @transform_3, window_bounds = array<i64: 16, 32>}]} {
    %c0 = arith.constant 0 : index
    %c0_0 = arith.constant 0 : index
    %0 = vector.load %arg1[%c0, %c0_0] : memref<16x32xf32, #tpu.memory_space<vmem>>, vector<16x32xf32>
    %c0_1 = arith.constant 0 : index
    %c0_2 = arith.constant 0 : index
    %1 = vector.load %arg2[%c0_1, %c0_2] : memref<32x32xf32, #tpu.memory_space<vmem>>, vector<32x32xf32>
    %cst = arith.constant dense<0.000000e+00> : vector<16x32xf32>
    %2 = tpu.matmul %0, %1, %cst {dimension_numbers = #tpu.dot_dimension_numbers<[1], [1], [0], [0], [0, 0, 1, 0], [], []>} : vector<16x32xf32>, vector<32x32xf32>, vector<16x32xf32> -> vector<16x32xf32>
    %c0_3 = arith.constant 0 : index
    %c0_4 = arith.constant 0 : index
    %3 = vector.load %arg3[%c0_3, %c0_4] : memref<1x32xf32, #tpu.memory_space<vmem>>, vector<1x32xf32>
    %4 = vector.broadcast %3 : vector<1x32xf32> to vector<16x32xf32>
    %5 = arith.addf %2, %4 : vector<16x32xf32>
    %c0_5 = arith.constant 0 : index
    %c0_6 = arith.constant 0 : index
    %6 = vector.load %arg4[%c0_5, %c0_6] : memref<16x32xf32, #tpu.memory_space<vmem>>, vector<16x32xf32>
    tpu.vector_store %arg4[%c0_5, %c0_6], %5 {strides = array<i32>} : memref<16x32xf32, #tpu.memory_space<vmem>>, vector<16x32xf32>,
    return
  }
  func.func @transform_0(%arg0: i32) -> (i32, i32) {
    %c0_i32 = arith.constant 0 : i32
    %c0_i32_0 = arith.constant 0 : i32
    return %arg0, %c0_i32 : i32, i32
  }
  func.func @transform_1(%arg0: i32) -> (i32, i32) {
    %c0_i32 = arith.constant 0 : i32
    %c0_i32_0 = arith.constant 0 : i32
    %c0_i32_1 = arith.constant 0 : i32
    return %c0_i32, %c0_i32_0 : i32, i32
  }
  func.func @transform_2(%arg0: i32) -> (i32, i32) {
    %c0_i32 = arith.constant 0 : i32
    %c0_i32_0 = arith.constant 0 : i32
    %c0_i32_1 = arith.constant 0 : i32
    return %c0_i32, %c0_i32_0 : i32, i32
  }
  func.func @transform_3(%arg0: i32) -> (i32, i32) {
    %c0_i32 = arith.constant 0 : i32
    %c0_i32_0 = arith.constant 0 : i32
    return %arg0, %c0_i32 : i32, i32
  }
}

</mosaic_0001>

<llo_original>
// kernel: tpu_custom_call.1
$region0: #{tpu_custom_call.1}
  #allocation0 [shape = 'u32[]', space=smem, size = 0x4, offset = 0x4, fixed_abs, tag = 'smem constant byte address 0x4 - core index']
  #allocation1 [shape = 'u32[144,128]{1,0:T(1,128)}', space=vmem, size = 0x12000, scoped, tag = 'internal scratch']
  %s0 = inlined_call_operand.hbm [shape: f32[16,32], index: 0, kind: input, shape index: {}]
  %s1 = inlined_call_operand.hbm [shape: f32[32,32], index: 1, kind: input, shape index: {}]
  %s2 = inlined_call_operand.vmem [shape: f32[1,32], index: 2, kind: input, shape index: {}]
  %s3 = inlined_call_operand.hbm [shape: f32[16,32], index: 3, kind: output, shape index: {}]
  %s4 = sld [smem:[#allocation0]]
  $region30: #{tpu_custom_call.1} parent=0
    _
  %s6 = ssub.s32 1, %s4
  %s7 = scalar_select 0, %s6, %s4
  $region1: #{tpu_custom_call.1} parent=0
    #allocation2 [shape = 'u8[8192]{0}', space=vmem, size = 0x2000, scoped, tag = 'input window, operand 0, single buffered']
    #allocation3 [shape = 's32[1]{0}', space=sflag, size = 0x4, scoped, tag = 'scoped memory for tpu_custom_call.1']
    #allocation4 [shape = 's32[1]{0}', space=sflag, size = 0x4, scoped, tag = 'scoped memory for tpu_custom_call.1']
    #allocation5 [shape = 'u8[16384]{0}', space=vmem, size = 0x4000, scoped, tag = 'input window, operand 1, single buffered']
    #allocation6 [shape = 's32[1]{0}', space=sflag, size = 0x4, scoped, tag = 'scoped memory for tpu_custom_call.1']
    #allocation7 [shape = 'u8[8192]{0}', space=vmem, size = 0x2000, scoped, tag = 'output window, operand 0, single buffered']
    %8 = vsyncpa [#allocation3], 0
    %9 = vsyncpa [#allocation6], 0
    %10 = vsyncpa [#allocation4], 0
    // Predicated region
    $region2: #{tpu_custom_call.1} parent=1 // pred_check
      _
    $region3: #{tpu_custom_call.1} parent=1 // pred_check_branch
      %12 = sbr.rel (0) target = $region5
    $region4: #{tpu_custom_call.1} parent=1 // pred_region
      %s14 = ssub.s32 256, 256
      %15 = vsyncadd [#allocation3], %s14
      %s16 = sshll.u32 [#allocation2], 4
      %s17 = int_to_ptr.vmem [resolvable:$true] %s16
      %22 = dma.hbm_to_vmem [thread:$0]  %s0, 256, %s17, [#allocation3], 128, 128, 8
    $region5: #{tpu_custom_call.1} parent=1 // pred_fallthru
      _
    // Predicated region
    $region6: #{tpu_custom_call.1} parent=1 // pred_check
      _
    $region7: #{tpu_custom_call.1} parent=1 // pred_check_branch
      %24 = sbr.rel (0) target = $region9
    $region8: #{tpu_custom_call.1} parent=1 // pred_region
      %s26 = ssub.s32 512, 512
      %27 = vsyncadd [#allocation6], %s26
      %s28 = sshll.u32 [#allocation5], 4
      %s29 = int_to_ptr.vmem [resolvable:$true] %s28
      %34 = dma.hbm_to_vmem [thread:$0]  %s1, 512, %s29, [#allocation6], 128, 128, 8
    $region9: #{tpu_custom_call.1} parent=1 // pred_fallthru
      _
    // Predicated region
    $region10: #{tpu_custom_call.1} parent=1 // pred_check
      _
    $region11: #{tpu_custom_call.1} parent=1 // pred_check_branch
      %36 = sbr.rel (0) target = $region13
    $region12: #{tpu_custom_call.1} parent=1 // pred_region
      _
    $region13: #{tpu_custom_call.1} parent=1 // pred_fallthru
      _
    // Predicated region
    $region14: #{tpu_custom_call.1} parent=1 // pred_check
      _
    $region15: #{tpu_custom_call.1} parent=1 // pred_check_branch
      %38 = sbr.rel (0) target = $region17
    $region16: #{tpu_custom_call.1} parent=1 // pred_region
      %39 = dma.done [#allocation3], 256
    $region17: #{tpu_custom_call.1} parent=1 // pred_fallthru
      _
    // Predicated region
    $region18: #{tpu_custom_call.1} parent=1 // pred_check
      _
    $region19: #{tpu_custom_call.1} parent=1 // pred_check_branch
      %41 = sbr.rel (0) target = $region21
    $region20: #{tpu_custom_call.1} parent=1 // pred_region
      %42 = dma.done [#allocation6], 512
    $region21: #{tpu_custom_call.1} parent=1 // pred_fallthru
      _
    %v43 = vld [vmem:[#allocation2] sm:$0xff]
    %v44 = vld [vmem:[#allocation2 + $0x8] sm:$0xff]
    %v45 = vld [vmem:[#allocation5] sm:$0xff]
    %v46 = vld [vmem:[#allocation5 + $0x8] sm:$0xff]
    %v47 = vld [vmem:[#allocation5 + $0x10] sm:$0xff]
    %v48 = vld [vmem:[#allocation5 + $0x18] sm:$0xff]
    %v49 = vld [vmem:[%s2] sm:$0x1]
    %v51 = vlaneseq
    %v52 = vshrl.u32 %v51, 7
    %v53 = vsub.s32 0, %v52
    %v54 = vrot.slane %v49, %v53
    %vm56 = vcmask 261120
    %v58 = vsel %vm56, %v43, 0
    %v61 = vsel %vm56, %v44, 0
    %v64 = vsel %vm56, %v45, 0
    %v67 = vsel %vm56, %v46, 0
    %v70 = vsel %vm56, %v47, 0
    %v73 = vsel %vm56, %v48, 0
    %75 = vmatprep.subr.mxu0 0.0
    %76 = vmatpush1.xpose.msra.mxu0 %v64
    %77 = vmatprep.subr.mxu0 0.0
    %78 = vmatpush1.xpose.msra.mxu0 %v67
    %79 = vmatprep.subr.mxu0 0.0
    %80 = vmatpush1.xpose.msra.mxu0 %v70
    %81 = vmatprep.subr.mxu0 0.0
    %82 = vmatpush1.xpose.msra.mxu0 %v73
    %83 = vmatprep.subr.mxu0 0.0
    %84 = vmatpush1.xpose.msra.mxu0 0.0
    %85 = vmatprep.subr.mxu0 0.0
    %86 = vmatpush1.xpose.msra.mxu0 0.0
    %87 = vmatprep.subr.mxu0 0.0
    %88 = vmatpush1.xpose.msra.mxu0 0.0
    %89 = vmatprep.subr.mxu0 0.0
    %90 = vmatpush1.xpose.msra.mxu0 0.0
    %91 = vmatprep.subr.mxu0 0.0
    %92 = vmatpush1.xpose.msra.mxu0 0.0
    %93 = vmatprep.subr.mxu0 0.0
    %94 = vmatpush1.xpose.msra.mxu0 0.0
    %95 = vmatprep.subr.mxu0 0.0
    %96 = vmatpush1.xpose.msra.mxu0 0.0
    %97 = vmatprep.subr.mxu0 0.0
    %98 = vmatpush1.xpose.msra.mxu0 0.0
    %99 = vmatprep.subr.mxu0 0.0
    %100 = vmatpush1.xpose.msra.mxu0 0.0
    %101 = vmatprep.subr.mxu0 0.0
    %102 = vmatpush1.xpose.msra.mxu0 0.0
    %103 = vmatprep.subr.mxu0 0.0
    %104 = vmatpush1.xpose.msra.mxu0 0.0
    %105 = vmatprep.subr.mxu0 0.0
    %106 = vmatpush1.xpose.msra.mxu0 0.0
    %107 = vmatprep.subr.mxu0 0.0
    %108 = vmatpush1.xpose.msra.mxu0 0.0
    %109 = vmatprep.subr.mxu0 0.0
    %110 = vmatpush1.xpose.msra.mxu0 0.0
    %111 = vmatprep.subr.mxu0 0.0
    %112 = vmatpush1.xpose.msra.mxu0 0.0
    %113 = vmatprep.subr.mxu0 0.0
    %114 = vmatpush1.xpose.msra.mxu0 0.0
    %115 = vmatprep.subr.mxu0 0.0
    %116 = vmatpush1.xpose.msra.mxu0 0.0
    %117 = vmatprep.subr.mxu0 0.0
    %118 = vmatpush1.xpose.msra.mxu0 0.0
    %119 = vmatprep.subr.mxu0 0.0
    %120 = vmatpush1.xpose.msra.mxu0 0.0
    %121 = vmatprep.subr.mxu0 0.0
    %122 = vmatpush1.xpose.msra.mxu0 0.0
    %123 = vmatprep.subr.mxu0 0.0
    %124 = vmatpush1.xpose.msra.mxu0 0.0
    %125 = vmatprep.subr.mxu0 0.0
    %126 = vmatpush1.xpose.msra.mxu0 0.0
    %127 = vmatprep.subr.mxu0 0.0
    %128 = vmatpush1.xpose.msra.mxu0 0.0
    %129 = vmatprep.subr.mxu0 0.0
    %130 = vmatpush1.xpose.msra.mxu0 0.0
    %131 = vmatprep.subr.mxu0 0.0
    %132 = vmatpush1.xpose.msra.mxu0 0.0
    %133 = vmatprep.subr.mxu0 0.0
    %134 = vmatpush1.xpose.msra.mxu0 0.0
    %135 = vmatprep.subr.mxu0 0.0
    %136 = vmatpush1.xpose.msra.mxu0 0.0
    %137 = vmatprep.subr.mxu0 0.0
    %138 = vmatpush1.xpose.msra.mxu0 0.0
    %139 = vmatprep.mubr.f32.mxu0 0.0
    %140 = vmatmul.mubr.f32.gmra.mrb[0].mxu0 %v58
    %v141 = vpop.f32.mrb[0].mxu0
    %v142 = vadd.f32 %v54, %v141
    %v143 = vpop.f32.mrb[0].mxu0
    %144 = vmatprep.mubr.f32.mxu0 0.0
    %145 = vmatmul.mubr.f32.gmra.mrb[0].mxu0 %v61
    %v146 = vpop.f32.mrb[0].mxu0
    %v147 = vadd.f32 %v54, %v146
    %v148 = vpop.f32.mrb[0].mxu0
    %149 = vdwg.mxu0
    %150 = vst.msk [vmem:[#allocation7] sm:$0xff] %vm56, %v142
    %151 = vst.msk [vmem:[#allocation7 + $0x8] sm:$0xff] %vm56, %v147
    // Predicated region
    $region22: #{tpu_custom_call.1} parent=1 // pred_check
      _
    $region23: #{tpu_custom_call.1} parent=1 // pred_check_branch
      %153 = sbr.rel (0) target = $region25
    $region24: #{tpu_custom_call.1} parent=1 // pred_region
      %s155 = ssub.s32 256, 256
      %156 = vsyncadd [#allocation4], %s155
      %s157 = sshll.u32 [#allocation7], 4
      %s158 = int_to_ptr.vmem [resolvable:$true] %s157
      %163 = dma.vmem_to_hbm [thread:$0]  %s158, 256, %s3, [#allocation4], 128, 128, 8
    $region25: #{tpu_custom_call.1} parent=1 // pred_fallthru
      _
    // Predicated region
    $region26: #{tpu_custom_call.1} parent=1 // pred_check
      _
    $region27: #{tpu_custom_call.1} parent=1 // pred_check_branch
      %165 = sbr.rel (0) target = $region29
    $region28: #{tpu_custom_call.1} parent=1 // pred_region
      %166 = dma.done [#allocation4], 256
    $region29: #{tpu_custom_call.1} parent=1 // pred_fallthru
      _
    %167 = vsyncpa [#allocation3], 1
    %168 = vsyncpa [#allocation6], 1
    %169 = vsyncpa [#allocation4], 1

</llo_original>
